<compile_context>
chip_gen: v7x
topology: tpu7x:2x2x1
jax: 0.10.0
libtpu: 0.0.40
codegen_flags: <defaults>
</compile_context>

<pallas_src>
import functools

import jax
import jax.numpy as jnp
from jax.experimental import pallas as pl
from jax.experimental.pallas import tpu as pltpu


# --------------------------------------------------------------------------- #
# Kernel
# --------------------------------------------------------------------------- #
def _clip_round_kernel(x_ref, o_ref, *, clip_min, clip_max, scale, inv_scale):
    # Compute in f32 so decimal rounding keeps precision for bf16/f16 inputs.
    x = x_ref[...].astype(jnp.float32)
    x = jnp.clip(x, clip_min, clip_max)
    # round-half-to-even (== torch.round).  Multiply by the precomputed
    # reciprocal instead of dividing: one vmul instead of an EUP/NR divide
    # sequence (<= 1 ulp deviation from torch's true divide).
    o_ref[...] = (jnp.round(x * scale) * inv_scale).astype(o_ref.dtype)


def _clip_round_ref(x, clip_min, clip_max, scale, inv_scale):
    """Plain-JAX path (tiny inputs / sub-128 tails) — same math as the kernel."""
    y = jnp.clip(x.astype(jnp.float32), clip_min, clip_max)
    return (jnp.round(y * scale) * inv_scale).astype(x.dtype)


# --------------------------------------------------------------------------- #
# Tiling helpers
# --------------------------------------------------------------------------- #
_LANE_CANDIDATES = (4096, 2048, 1024, 512, 256, 128)
_MIN_KERNEL_ELEMS = 1024           # below this a kernel launch isn't worth it
_MIN_SPLIT_BYTES = 1024 * 1024     # force >= 2 grid steps above this


def _sublane_packing(dtype):
    # Native sublane packing per 32-bit vreg row: 8 (4B), 16 (2B), 32 (1B).
    return {4: 8, 2: 16, 1: 32}.get(jnp.dtype(dtype).itemsize, 8)


def _target_tile_bytes():
    # ~2 MiB tiles everywhere (8 MiB double-buffered in+out fits v5e's 16 MiB
    # scoped-VMEM default); ~4 MiB on v7x where HBM is ~2.3x faster and the
    # fixed per-step overhead is a larger fraction (16 MiB fits its 32 MiB).
    try:
        kind = jax.devices()[0].device_kind.lower()
    except Exception:  # pragma: no cover - device query should not fail
        kind = ""
    return 4 * 1024 * 1024 if "v7" in kind else 2 * 1024 * 1024


def _pick_lanes(n, sub):
    divisors = [c for c in _LANE_CANDIDATES if n % c == 0]
    for c in divisors:                 # descending: widest with full sublanes
        if n // c >= sub:
            return c
    if divisors:                       # small n: smallest divisor -> most rows
        return divisors[-1]
    return 128                         # no divisor: remainder handled as tail


# --------------------------------------------------------------------------- #
# Public wrapper
# --------------------------------------------------------------------------- #
def clip_round(x, clip_min=-1.0, clip_max=1.0, decimals=4, *, donate=False):
    """clamp(x, clip_min, clip_max) then round to `decimals` decimal places."""
    orig_shape = x.shape
    orig_dtype = x.dtype
    if not jnp.issubdtype(orig_dtype, jnp.floating):
        raise TypeError(f"clip_round expects a floating dtype, got {orig_dtype}")

    n = x.size
    if n == 0:
        return x

    scale = float(10 ** decimals)
    inv_scale = 1.0 / scale
    clip_min = float(clip_min)
    clip_max = float(clip_max)

    x_flat = x.reshape(-1)
    if n < _MIN_KERNEL_ELEMS:
        return _clip_round_ref(x_flat, clip_min, clip_max, scale,
                               inv_scale).reshape(orig_shape)

    itemsize = jnp.dtype(orig_dtype).itemsize
    sub = _sublane_packing(orig_dtype)
    lanes = _pick_lanes(n, sub)

    bulk = (n // lanes) * lanes
    tail = n - bulk
    rows = bulk // lanes
    bulk_bytes = bulk * itemsize

    # Tile-row selection: ~target bytes, multiple of the dtype's sublane
    # packing, preferring an exact divisor of `rows` (no masked last block),
    # and >= 2 grid steps for slabs above ~1 MiB (pipeline overlap + 2nd TC).
    target_rows = max(sub, (_target_tile_bytes() // (lanes * itemsize)) // sub * sub)
    if bulk_bytes >= _MIN_SPLIT_BYTES and rows >= 2 * sub:
        target_rows = min(target_rows, max(sub, (rows // 2) // sub * sub))

    if rows <= target_rows:
        tile_rows = rows               # single full-extent block (small slab)
    else:
        tile_rows = None
        t = target_rows
        while t >= sub:                # largest divisor of rows, multiple of sub
            if rows % t == 0:
                tile_rows = t
                break
            t -= sub
        if tile_rows is None:
            tile_rows = target_rows    # no divisor: masked partial last block

    grid = (pl.cdiv(rows, tile_rows),)

    kernel = functools.partial(
        _clip_round_kernel,
        clip_min=clip_min, clip_max=clip_max, scale=scale, inv_scale=inv_scale)

    x2d = (x_flat if tail == 0 else x_flat[:bulk]).reshape(rows, lanes)

    out2d = pl.pallas_call(
        kernel,
        out_shape=jax.ShapeDtypeStruct((rows, lanes), orig_dtype),
        grid_spec=pltpu.PrefetchScalarGridSpec(
            num_scalar_prefetch=0,
            grid=grid,
            in_specs=[pl.BlockSpec((tile_rows, lanes), lambda i: (i, 0))],
            out_specs=pl.BlockSpec((tile_rows, lanes), lambda i: (i, 0)),
        ),
        compiler_params=pltpu.CompilerParams(
            dimension_semantics=("parallel",),
        ),
        cost_estimate=pl.CostEstimate(
            flops=6 * bulk,
            transcendentals=0,
            bytes_accessed=2 * bulk * itemsize,
        ),
        input_output_aliases=({0: 0} if donate else {}),
    )(x2d)

    out_flat = out2d.reshape(-1)
    if tail:
        # Corner path (n % 128 != 0): the < 128-element tail is computed in
        # plain JAX.  The concatenate re-materializes the output once; folding
        # the tail into the kernel would need a 1-D / manual-DMA layout that
        # isn't worth it for the lane-friendly VAE activation shapes.
        tail_out = _clip_round_ref(x_flat[bulk:], clip_min, clip_max,
                                   scale, inv_scale)
        out_flat = jnp.concatenate([out_flat, tail_out])
    return out_flat.reshape(orig_shape)


# --------------------------------------------------------------------------- #
# Self-test
# --------------------------------------------------------------------------- #
if __name__ == "__main__":
    key = jax.random.PRNGKey(0)
    k1, k2, k3, k4 = jax.random.split(key, 4)

    def torch_ref(x, lo=-1.0, hi=1.0, dec=4):
        # torch-style reference: true divide by 10**decimals.
        s = float(10 ** dec)
        y = jnp.clip(x.astype(jnp.float32), lo, hi)
        return (jnp.round(y * s) / s).astype(x.dtype)

    # 1) Primary case: NCHW VAE-style activation, f32 (single-block grid).
    x = jax.random.normal(k1, (2, 4, 16, 16), dtype=jnp.float32) * 2.0
    y = jax.block_until_ready(clip_round(x, clip_min=-1.0, clip_max=1.0, decimals=4))
    assert y.shape == x.shape and y.dtype == x.dtype
    assert jnp.allclose(y, torch_ref(x), atol=1e-6), "f32 mismatch vs torch-style reference"

    # 2) n not a multiple of 128 -> bulk kernel + tiny plain-JAX tail.
    x2 = jax.random.normal(k2, (3, 400), dtype=jnp.float32) * 2.0
    y2 = jax.block_until_ready(clip_round(x2))
    assert y2.shape == x2.shape
    assert jnp.allclose(y2, torch_ref(x2), atol=1e-6), "tail-path mismatch"

    # 3) bf16 input: f32 internal math, bf16 store, native (16,128) tiling.
    xb = (jax.random.normal(k3, (2, 4, 16, 16)) * 2.0).astype(jnp.bfloat16)
    yb = jax.block_until_ready(clip_round(xb))
    assert yb.shape == xb.shape and yb.dtype == jnp.bfloat16
    assert jnp.allclose(yb.astype(jnp.float32),
                        torch_ref(xb).astype(jnp.float32), atol=1e-2), "bf16 mismatch"

    # 4) rows (4099, prime) not divisible by tile_rows -> multi-step grid with
    #    a masked partial last block.
    x4 = jax.random.normal(k4, (4099, 128), dtype=jnp.float32) * 2.0
    y4 = jax.block_until_ready(clip_round(x4))
    assert y4.shape == x4.shape
    assert jnp.allclose(y4, torch_ref(x4), atol=1e-6), "partial-last-block mismatch"

    print("KERNEL_OK")
</pallas_src>

<mosaic_0001>
module attributes {stable_mosaic.version = 11 : i64} {
  func.func @_clip_round_kernel(%arg0: i32, %arg1: memref<8x256xf32, #tpu.memory_space<vmem>>, %arg2: memref<8x256xf32, #tpu.memory_space<vmem>>) attributes {dimension_semantics = [#tpu.dimension_semantics<parallel>], iteration_bounds = array<i64: 1>, scalar_prefetch = 0 : i64, scratch_operands = 0 : i64, tpu.core_type = #tpu.core_type<tc>, window_params = [{transform_indices = @transform_0, window_bounds = array<i64: 8, 256>}, {transform_indices = @transform_1, window_bounds = array<i64: 8, 256>}]} {
    %c0 = arith.constant 0 : index
    %c0_0 = arith.constant 0 : index
    %0 = vector.load %arg1[%c0, %c0_0] : memref<8x256xf32, #tpu.memory_space<vmem>>, vector<8x256xf32>
    %cst = arith.constant -1.000000e+00 : f32
    %cst_1 = arith.constant 1.000000e+00 : f32
    %1 = vector.broadcast %cst : f32 to vector<8x256xf32>
    %2 = arith.maximumf %1, %0 : vector<8x256xf32>
    %3 = vector.broadcast %cst_1 : f32 to vector<8x256xf32>
    %4 = arith.minimumf %3, %2 : vector<8x256xf32>
    %cst_2 = arith.constant 1.000000e+04 : f32
    %5 = vector.broadcast %cst_2 : f32 to vector<8x256xf32>
    %6 = arith.mulf %4, %5 : vector<8x256xf32>
    %7 = math.roundeven %6 : vector<8x256xf32>
    %cst_3 = arith.constant 9.99999974E-5 : f32
    %8 = vector.broadcast %cst_3 : f32 to vector<8x256xf32>
    %9 = arith.mulf %7, %8 : vector<8x256xf32>
    %c0_4 = arith.constant 0 : index
    %c0_5 = arith.constant 0 : index
    %10 = vector.load %arg2[%c0_4, %c0_5] : memref<8x256xf32, #tpu.memory_space<vmem>>, vector<8x256xf32>
    tpu.vector_store %arg2[%c0_4, %c0_5], %9 {strides = array<i32>} : memref<8x256xf32, #tpu.memory_space<vmem>>, vector<8x256xf32>,
    return
  }
  func.func @transform_0(%arg0: i32) -> (i32, i32) {
    %c0_i32 = arith.constant 0 : i32
    %c0_i32_0 = arith.constant 0 : i32
    return %arg0, %c0_i32 : i32, i32
  }
  func.func @transform_1(%arg0: i32) -> (i32, i32) {
    %c0_i32 = arith.constant 0 : i32
    %c0_i32_0 = arith.constant 0 : i32
    return %arg0, %c0_i32 : i32, i32
  }
}

</mosaic_0001>

<llo_original>
// kernel: tpu_custom_call.1
$region0: #{tpu_custom_call.1}
  #allocation0 [shape = 'u32[]', space=smem, size = 0x4, offset = 0x4, fixed_abs, tag = 'smem constant byte address 0x4 - core index']
  #allocation1 [shape = 'u32[144,128]{1,0:T(1,128)}', space=vmem, size = 0x12000, scoped, tag = 'internal scratch']
  %s0 = inlined_call_operand.hbm [shape: f32[8,256], index: 0, kind: input, shape index: {}]
  %s1 = inlined_call_operand.hbm [shape: f32[8,256], index: 1, kind: output, shape index: {}]
  %s2 = sld [smem:[#allocation0]]
  $region18: #{tpu_custom_call.1} parent=0
    _
  %s4 = ssub.s32 1, %s2
  %s5 = scalar_select 0, %s4, %s2
  $region1: #{tpu_custom_call.1} parent=0
    #allocation2 [shape = 'u8[8192]{0}', space=vmem, size = 0x2000, scoped, tag = 'input window, operand 0, single buffered']
    #allocation3 [shape = 's32[1]{0}', space=sflag, size = 0x4, scoped, tag = 'scoped memory for tpu_custom_call.1']
    #allocation4 [shape = 's32[1]{0}', space=sflag, size = 0x4, scoped, tag = 'scoped memory for tpu_custom_call.1']
    #allocation5 [shape = 'u8[8192]{0}', space=vmem, size = 0x2000, scoped, tag = 'output window, operand 0, single buffered']
    %6 = vsyncpa [#allocation3], 0
    %7 = vsyncpa [#allocation4], 0
    // Predicated region
    $region2: #{tpu_custom_call.1} parent=1 // pred_check
      _
    $region3: #{tpu_custom_call.1} parent=1 // pred_check_branch
      %9 = sbr.rel (0) target = $region5
    $region4: #{tpu_custom_call.1} parent=1 // pred_region
      %s11 = ssub.s32 256, 256
      %12 = vsyncadd [#allocation3], %s11
      %s14 = sshll.u32 [#allocation2], 4
      %s15 = int_to_ptr.vmem [resolvable:$true] %s14
      %17 = dma.hbm_to_vmem [thread:$0]  %s0, 256, %s15, [#allocation3]
    $region5: #{tpu_custom_call.1} parent=1 // pred_fallthru
      _
    // Predicated region
    $region6: #{tpu_custom_call.1} parent=1 // pred_check
      _
    $region7: #{tpu_custom_call.1} parent=1 // pred_check_branch
      %19 = sbr.rel (0) target = $region9
    $region8: #{tpu_custom_call.1} parent=1 // pred_region
      %20 = dma.done [#allocation3], 256
    $region9: #{tpu_custom_call.1} parent=1 // pred_fallthru
      _
    %v21 = vld [vmem:[#allocation2] sm:$0xff]
    %v22 = vld [vmem:[#allocation2 + $0x8] sm:$0xff]
    %v23 = vmax.f32 %v21, -1.0
    %v24 = vmax.f32 %v22, -1.0
    %v25 = vmin.f32 %v23, 1.0
    %v26 = vmin.f32 %v24, 1.0
    %v27 = vmul.f32 %v25, 10000.0
    %v28 = vmul.f32 %v26, 10000.0
    %v29 = vround.ne.pseudo %v27
    %v30 = vround.ne.pseudo %v28
    %v31 = vmul.f32 %v29, 0.0001
    %v32 = vmul.f32 %v30, 0.0001
    %33 = vst [vmem:[#allocation5] sm:$0xff] %v31
    %34 = vst [vmem:[#allocation5 + $0x8] sm:$0xff] %v32
    // Predicated region
    $region10: #{tpu_custom_call.1} parent=1 // pred_check
      _
    $region11: #{tpu_custom_call.1} parent=1 // pred_check_branch
      %36 = sbr.rel (0) target = $region13
    $region12: #{tpu_custom_call.1} parent=1 // pred_region
      %s38 = ssub.s32 256, 256
      %39 = vsyncadd [#allocation4], %s38
      %s41 = sshll.u32 [#allocation5], 4
      %s42 = int_to_ptr.vmem [resolvable:$true] %s41
      %44 = dma.vmem_to_hbm [thread:$0]  %s42, 256, %s1, [#allocation4]
    $region13: #{tpu_custom_call.1} parent=1 // pred_fallthru
      _
    // Predicated region
    $region14: #{tpu_custom_call.1} parent=1 // pred_check
      _
    $region15: #{tpu_custom_call.1} parent=1 // pred_check_branch
      %46 = sbr.rel (0) target = $region17
    $region16: #{tpu_custom_call.1} parent=1 // pred_region
      %47 = dma.done [#allocation4], 256
    $region17: #{tpu_custom_call.1} parent=1 // pred_fallthru
      _
    %48 = vsyncpa [#allocation3], 1
    %49 = vsyncpa [#allocation4], 1

</llo_original>
